<compile_context>
chip_gen: v7x
topology: tpu7x:2x2x1
jax: 0.10.0
libtpu: 0.0.40
codegen_flags: <defaults>
</compile_context>

<pallas_src>
import functools
import math

import jax
import jax.numpy as jnp
from jax import lax
from jax.experimental import pallas as pl
from jax.experimental.pallas import tpu as pltpu


def _round_up(x, m):
    return ((x + m - 1) // m) * m


# ---------------------------------------------------------------------------
# Pass 1: global sum pool.  Reduction axis (hw) is last in the grid and
# marked "arbitrary"; rows axis is "parallel" (megacore sharding).
# ---------------------------------------------------------------------------
def _make_pool_sum_kernel(hw, hw_tile, needs_mask):
    def kernel(x_ref, sum_ref):
        @pl.when(pl.program_id(1) == 0)
        def _():
            sum_ref[...] = jnp.zeros_like(sum_ref)

        x = x_ref[...].astype(jnp.float32)
        if needs_mask:
            # Zero out lanes beyond the true H*W in the (partial) edge block.
            col = (pl.program_id(1) * hw_tile
                   + lax.broadcasted_iota(jnp.int32, x.shape, 1))
            x = jnp.where(col < hw, x, 0.0)
        sum_ref[...] += jnp.sum(x, axis=-1, keepdims=True)

    return kernel


# ---------------------------------------------------------------------------
# Pass 3: broadcast multiply.  Both grid axes independent -> "parallel".
# Out-of-bounds writes in partial edge blocks are dropped by Pallas.
# ---------------------------------------------------------------------------
def _scale_mul_kernel(s_ref, x_ref, o_ref):
    o_ref[...] = x_ref[...] * s_ref[...]


def _choose_tiles(rows, hw, itemsize,
                  block_budget_bytes=4 * 1024 * 1024, max_lane_tile=2048):
    """Pick a lane-dense (row_tile, hw_tile).

    hw_tile: the full H*W when small (block dim == array dim is always
    legal), else a 128-multiple (2048 lanes).  row_tile: the full row count
    when it fits the ~4 MiB per-block budget, else the largest multiple of 8
    that does.  Double-buffered in+out at 4 MiB blocks stays under 32 MiB.
    """
    hw_tile = hw if hw <= max_lane_tile else max_lane_tile
    lane_bytes = _round_up(hw_tile, 128) * itemsize
    max_rows = max(8, (block_budget_bytes // lane_bytes) // 8 * 8)
    row_tile = rows if rows <= max_rows else max_rows
    return row_tile, hw_tile


@functools.partial(jax.jit, static_argnames=("row_tile", "hw_tile"))
def _eca_impl(x, conv_weight, *, row_tile, hw_tile):
    B, C, H, W = x.shape
    K = conv_weight.shape[0]
    rows, hw = B * C, H * W
    itemsize = jnp.dtype(x.dtype).itemsize

    xf = x.reshape(rows, hw)                      # free reshape (contiguous)
    grid_r = pl.cdiv(rows, row_tile)
    grid_h = pl.cdiv(hw, hw_tile)
    needs_mask = (hw % hw_tile) != 0
    vmem_limit = 32 * 1024 * 1024

    # ---- Pass 1: Pallas tiled sum over spatial -> (rows, 1) f32 ----
    sums = pl.pallas_call(
        _make_pool_sum_kernel(hw, hw_tile, needs_mask),
        out_shape=jax.ShapeDtypeStruct((rows, 1), jnp.float32),
        grid=(grid_r, grid_h),
        in_specs=[pl.BlockSpec((row_tile, hw_tile), lambda r, h: (r, h))],
        out_specs=pl.BlockSpec((row_tile, 1), lambda r, h: (r, 0)),
        compiler_params=pltpu.CompilerParams(
            dimension_semantics=("parallel", "arbitrary"),
            vmem_limit_bytes=vmem_limit),
        cost_estimate=pl.CostEstimate(
            flops=rows * hw, transcendentals=0,
            bytes_accessed=rows * hw * itemsize + rows * 4),
    )(xf)

    # ---- Pass 2: tiny (B, C) path: mean -> conv1d(K) -> sigmoid (JAX) ----
    pooled = sums[:, 0].reshape(B, C) * jnp.float32(1.0 / hw)   # true H*W
    pad = (K - 1) // 2                 # matches PyTorch Conv1d padding (odd K)
    padded = jnp.pad(pooled, ((0, 0), (pad, pad)))
    conv = sum(conv_weight[j].astype(jnp.float32) * padded[:, j:j + C]
               for j in range(K))
    # Pre-cast the scale once (B*C values): no per-element casts in pass 3.
    scale_col = jax.nn.sigmoid(conv).reshape(rows, 1).astype(x.dtype)

    # ---- Pass 3: Pallas broadcast multiply, lane-dense tiles ----
    out = pl.pallas_call(
        _scale_mul_kernel,
        out_shape=jax.ShapeDtypeStruct((rows, hw), x.dtype),
        grid=(grid_r, grid_h),
        in_specs=[
            pl.BlockSpec((row_tile, 1), lambda r, h: (r, 0)),        # scale
            pl.BlockSpec((row_tile, hw_tile), lambda r, h: (r, h)),  # x
        ],
        out_specs=pl.BlockSpec((row_tile, hw_tile), lambda r, h: (r, h)),
        compiler_params=pltpu.CompilerParams(
            dimension_semantics=("parallel", "parallel"),
            vmem_limit_bytes=vmem_limit),
        cost_estimate=pl.CostEstimate(
            flops=rows * hw, transcendentals=0,
            bytes_accessed=2 * rows * hw * itemsize + rows * itemsize),
    )(scale_col, xf)

    return out.reshape(B, C, H, W)


def eca_block_forward(x, conv_weight):
    """ECA forward.  x: (B, C, H, W); conv_weight: (K,) -> (B, C, H, W)."""
    B, C, H, W = x.shape
    row_tile, hw_tile = _choose_tiles(B * C, H * W,
                                      jnp.dtype(x.dtype).itemsize)
    return _eca_impl(x, conv_weight, row_tile=row_tile, hw_tile=hw_tile)


def eca_reference(x, conv_weight):
    """Pure-JAX reference matching the PyTorch forward."""
    B, C, H, W = x.shape
    K = conv_weight.shape[0]
    pad = (K - 1) // 2
    pooled = jnp.mean(x.astype(jnp.float32), axis=(2, 3))               # (B, C)
    padded = jnp.pad(pooled, ((0, 0), (pad, pad)))
    conv = sum(conv_weight[j] * padded[:, j:j + C] for j in range(K))   # (B, C)
    scale = jax.nn.sigmoid(conv)
    return (x.astype(jnp.float32) * scale[:, :, None, None]).astype(x.dtype)


if __name__ == "__main__":
    def _kernel_size(channels, gamma=2, b=1):
        # Same formula as the PyTorch __init__ (always returns odd K).
        k = int(abs((math.log(channels, 2) + b) / gamma))
        return k if k % 2 else k + 1

    key = jax.random.PRNGKey(0)

    # (shape, forced (row_tile, hw_tile) or None for auto)
    cases = [
        ((2, 4, 16, 16), None),        # aligned shapes, auto tiles
        ((2, 12, 14, 14), None),       # non-128 H*W, full-dim tiles
        ((2, 12, 14, 14), (16, 128)),  # forced ragged tiles: edge blocks + lane mask
        ((1, 16, 36, 64), None),       # H*W > 2048: tiled + masked reduction
    ]
    for (B, C, H, W), forced in cases:
        K = _kernel_size(C)
        key, kx, kw = jax.random.split(key, 3)
        x = jax.random.normal(kx, (B, C, H, W), dtype=jnp.float32)
        conv_weight = jax.random.normal(kw, (K,), dtype=jnp.float32) * 0.5

        if forced is None:
            out = eca_block_forward(x, conv_weight)
        else:
            rt, ht = forced
            out = _eca_impl(x, conv_weight, row_tile=rt, hw_tile=ht)
        out = jax.block_until_ready(out)

        ref = eca_reference(x, conv_weight)
        assert out.shape == (B, C, H, W)
        assert jnp.allclose(out, ref, atol=1e-5, rtol=1e-5), \
            f"mismatch at shape {(B, C, H, W)} (tiles={forced})"

    print("KERNEL_OK")
</pallas_src>

<mosaic_0001>
module attributes {stable_mosaic.version = 11 : i64} {
  func.func @_scale_mul_kernel(%arg0: i32, %arg1: i32, %arg2: memref<8x1xf32, #tpu.memory_space<vmem>>, %arg3: memref<8x256xf32, #tpu.memory_space<vmem>>, %arg4: memref<8x256xf32, #tpu.memory_space<vmem>>) attributes {dimension_semantics = [#tpu.dimension_semantics<parallel>, #tpu.dimension_semantics<parallel>], iteration_bounds = array<i64: 1, 1>, scalar_prefetch = 0 : i64, scratch_operands = 0 : i64, tpu.core_type = #tpu.core_type<tc>, window_params = [{transform_indices = @transform_0, window_bounds = array<i64: 8, 1>}, {transform_indices = @transform_1, window_bounds = array<i64: 8, 256>}, {transform_indices = @transform_2, window_bounds = array<i64: 8, 256>}]} {
    %c0 = arith.constant 0 : index
    %c0_0 = arith.constant 0 : index
    %0 = vector.load %arg3[%c0, %c0_0] : memref<8x256xf32, #tpu.memory_space<vmem>>, vector<8x256xf32>
    %c0_1 = arith.constant 0 : index
    %c0_2 = arith.constant 0 : index
    %1 = vector.load %arg2[%c0_1, %c0_2] : memref<8x1xf32, #tpu.memory_space<vmem>>, vector<8x1xf32>
    %2 = vector.broadcast %1 : vector<8x1xf32> to vector<8x256xf32>
    %3 = arith.mulf %0, %2 : vector<8x256xf32>
    %c0_3 = arith.constant 0 : index
    %c0_4 = arith.constant 0 : index
    %4 = vector.load %arg4[%c0_3, %c0_4] : memref<8x256xf32, #tpu.memory_space<vmem>>, vector<8x256xf32>
    tpu.vector_store %arg4[%c0_3, %c0_4], %3 {strides = array<i32>} : memref<8x256xf32, #tpu.memory_space<vmem>>, vector<8x256xf32>,
    return
  }
  func.func @transform_0(%arg0: i32, %arg1: i32) -> (i32, i32) {
    %c0_i32 = arith.constant 0 : i32
    %c0_i32_0 = arith.constant 0 : i32
    return %arg0, %c0_i32 : i32, i32
  }
  func.func @transform_1(%arg0: i32, %arg1: i32) -> (i32, i32) {
    %c0_i32 = arith.constant 0 : i32
    return %arg0, %arg1 : i32, i32
  }
  func.func @transform_2(%arg0: i32, %arg1: i32) -> (i32, i32) {
    %c0_i32 = arith.constant 0 : i32
    return %arg0, %arg1 : i32, i32
  }
}

module attributes {stable_mosaic.version = 11 : i64} {
  func.func @kernel(%arg0: i32, %arg1: i32, %arg2: memref<8x256xf32, #tpu.memory_space<vmem>>, %arg3: memref<8x1xf32, #tpu.memory_space<vmem>>) attributes {dimension_semantics = [#tpu.dimension_semantics<parallel>, #tpu.dimension_semantics<arbitrary>], iteration_bounds = array<i64: 1, 1>, scalar_prefetch = 0 : i64, scratch_operands = 0 : i64, tpu.core_type = #tpu.core_type<tc>, window_params = [{transform_indices = @transform_0, window_bounds = array<i64: 8, 256>}, {transform_indices = @transform_1, window_bounds = array<i64: 8, 1>}]} {
    %c0_i32 = arith.constant 0 : i32
    %0 = arith.cmpi eq, %arg1, %c0_i32 : i32
    %1 = arith.extui %0 : i1 to i32
    %c0_i32_0 = arith.constant 0 : i32
    %2 = arith.cmpi ne, %1, %c0_i32_0 : i32
    scf.if %2 {
      %cst_6 = arith.constant 0.000000e+00 : f32
      %9 = vector.broadcast %cst_6 : f32 to vector<8x1xf32>
      %c0_7 = arith.constant 0 : index
      %c0_8 = arith.constant 0 : index
      %10 = vector.load %arg3[%c0_7, %c0_8] : memref<8x1xf32, #tpu.memory_space<vmem>>, vector<8x1xf32>
      tpu.vector_store %arg3[%c0_7, %c0_8], %9 {strides = array<i32>} : memref<8x1xf32, #tpu.memory_space<vmem>>, vector<8x1xf32>,
    } else {
    }
    %c0 = arith.constant 0 : index
    %c0_1 = arith.constant 0 : index
    %3 = vector.load %arg2[%c0, %c0_1] : memref<8x256xf32, #tpu.memory_space<vmem>>, vector<8x256xf32>
    %c0_2 = arith.constant 0 : index
    %c0_3 = arith.constant 0 : index
    %4 = vector.load %arg3[%c0_2, %c0_3] : memref<8x1xf32, #tpu.memory_space<vmem>>, vector<8x1xf32>
    %cst = arith.constant dense<0.000000e+00> : vector<8xf32>
    %5 = vector.multi_reduction <add>, %3, %cst [1] : vector<8x256xf32> to vector<8xf32>
    %6 = vector.shape_cast %5 : vector<8xf32> to vector<8x1xf32>
    %7 = arith.addf %4, %6 : vector<8x1xf32>
    %c0_4 = arith.constant 0 : index
    %c0_5 = arith.constant 0 : index
    %8 = vector.load %arg3[%c0_4, %c0_5] : memref<8x1xf32, #tpu.memory_space<vmem>>, vector<8x1xf32>
    tpu.vector_store %arg3[%c0_4, %c0_5], %7 {strides = array<i32>} : memref<8x1xf32, #tpu.memory_space<vmem>>, vector<8x1xf32>,
    return
  }
  func.func @transform_0(%arg0: i32, %arg1: i32) -> (i32, i32) {
    %c0_i32 = arith.constant 0 : i32
    return %arg0, %arg1 : i32, i32
  }
  func.func @transform_1(%arg0: i32, %arg1: i32) -> (i32, i32) {
    %c0_i32 = arith.constant 0 : i32
    %c0_i32_0 = arith.constant 0 : i32
    return %arg0, %c0_i32 : i32, i32
  }
}

</mosaic_0001>

<llo_original>
// kernel: _eca_impl.2
$region0: #{_eca_impl.2}
  #allocation0 [shape = 'u32[]', space=smem, size = 0x4, offset = 0x4, fixed_abs, tag = 'smem constant byte address 0x4 - core index']
  #allocation1 [shape = 'u32[144,128]{1,0:T(1,128)}', space=vmem, size = 0x12000, scoped, tag = 'internal scratch']
  %s0 = inlined_call_operand.vmem [shape: f32[8,256], index: 0, kind: input, shape index: {}]
  %s1 = inlined_call_operand.vmem [shape: f32[8,1], index: 1, kind: output, shape index: {}]
  %s2 = sld [smem:[#allocation0]]
  $region18: #{_eca_impl.2} parent=0
    _
  %s4 = ssub.s32 1, %s2
  %s5 = scalar_select 0, %s4, %s2
  // Predicated region
  $region2: #{_eca_impl.2} parent=0 // pred_check
    _
  $region3: #{_eca_impl.2} parent=0 // pred_check_branch
    %7 = sbr.rel (0) target = $region5
  $region4: #{_eca_impl.2} parent=0 // pred_region
    _
  $region5: #{_eca_impl.2} parent=0 // pred_fallthru
    _
  %p8 = scmp.eq.s32.totalorder 0, 0
  // Predicated region
  $region6: #{_eca_impl.2} parent=0 // pred_check
    %p9 = pneg %p8
  $region7: #{_eca_impl.2} parent=0 // pred_check_branch
    %11 = sbr.rel (%p9) target = $region9
  $region8: #{_eca_impl.2} parent=0 // pred_region
    %vm12 = vcmask 7168
    %13 = vst.msk [vmem:[%s1] sm:$0xff] %vm12, 0.0
  $region9: #{_eca_impl.2} parent=0 // pred_fallthru
    _
  %v14 = vld [vmem:[%s0] sm:$0xff]
  %v15 = vld [vmem:[%s0 + $0x8] sm:$0xff]
  %v16 = vld [vmem:[%s1] sm:$0xff]
  %v17 = vadd.f32 %v14, %v15
  %18 = vadd.xlane.f32.xlu0 %v17
  %v19 = vpop.xlane.xlu0 %18
  %v20 = vadd.f32 %v16, %v19
  %vm21 = vcmask 7168
  %22 = vst.msk [vmem:[%s1] sm:$0xff] %vm21, %v20
  // Predicated region
  $region10: #{_eca_impl.2} parent=0 // pred_check
    _
  $region11: #{_eca_impl.2} parent=0 // pred_check_branch
    %24 = sbr.rel (0) target = $region13
  $region12: #{_eca_impl.2} parent=0 // pred_region
    _
  $region13: #{_eca_impl.2} parent=0 // pred_fallthru
    _
  // Predicated region
  $region14: #{_eca_impl.2} parent=0 // pred_check
    _
  $region15: #{_eca_impl.2} parent=0 // pred_check_branch
    %26 = sbr.rel (0) target = $region17
  $region16: #{_eca_impl.2} parent=0 // pred_region
    _
  $region17: #{_eca_impl.2} parent=0 // pred_fallthru
    _

// kernel: _eca_impl.3
$region0: #{_eca_impl.3}
  #allocation0 [shape = 'u32[]', space=smem, size = 0x4, offset = 0x4, fixed_abs, tag = 'smem constant byte address 0x4 - core index']
  #allocation1 [shape = 'u32[144,128]{1,0:T(1,128)}', space=vmem, size = 0x12000, scoped, tag = 'internal scratch']
  %s0 = inlined_call_operand.vmem [shape: f32[8,1], index: 0, kind: input, shape index: {}]
  %s1 = inlined_call_operand.vmem [shape: f32[8,256], index: 1, kind: input, shape index: {}]
  %s2 = inlined_call_operand.vmem [shape: f32[8,256], index: 2, kind: output, shape index: {}]
  %s3 = sld [smem:[#allocation0]]
  $region18: #{_eca_impl.3} parent=0
    _
  %s5 = ssub.s32 1, %s3
  %s6 = scalar_select 0, %s5, %s3
  // Predicated region
  $region2: #{_eca_impl.3} parent=0 // pred_check
    _
  $region3: #{_eca_impl.3} parent=0 // pred_check_branch
    %8 = sbr.rel (0) target = $region5
  $region4: #{_eca_impl.3} parent=0 // pred_region
    _
  $region5: #{_eca_impl.3} parent=0 // pred_fallthru
    _
  // Predicated region
  $region6: #{_eca_impl.3} parent=0 // pred_check
    _
  $region7: #{_eca_impl.3} parent=0 // pred_check_branch
    %10 = sbr.rel (0) target = $region9
  $region8: #{_eca_impl.3} parent=0 // pred_region
    _
  $region9: #{_eca_impl.3} parent=0 // pred_fallthru
    _
  %v11 = vld [vmem:[%s1] sm:$0xff]
  %v12 = vld [vmem:[%s1 + $0x8] sm:$0xff]
  %v13 = vld [vmem:[%s0] sm:$0xff]
  %15 = vset.pattern.permute.xlu0 0
  %16 = vperm.xlu0 %15, %v13
  %v17 = vpop.permute.xlu0 %16
  %v19 = vmul.f32 %v11, %v17
  %v20 = vmul.f32 %v12, %v17
  %21 = vst [vmem:[%s2] sm:$0xff] %v19
  %22 = vst [vmem:[%s2 + $0x8] sm:$0xff] %v20
  // Predicated region
  $region10: #{_eca_impl.3} parent=0 // pred_check
    _
  $region11: #{_eca_impl.3} parent=0 // pred_check_branch
    %24 = sbr.rel (0) target = $region13
  $region12: #{_eca_impl.3} parent=0 // pred_region
    _
  $region13: #{_eca_impl.3} parent=0 // pred_fallthru
    _
  // Predicated region
  $region14: #{_eca_impl.3} parent=0 // pred_check
    _
  $region15: #{_eca_impl.3} parent=0 // pred_check_branch
    %26 = sbr.rel (0) target = $region17
  $region16: #{_eca_impl.3} parent=0 // pred_region
    _
  $region17: #{_eca_impl.3} parent=0 // pred_fallthru
    _

</llo_original>
